<compile_context>
chip_gen: v6e
topology: v6e:2x2x1
jax: 0.10.0
libtpu: 0.0.40
codegen_flags: <defaults>
</compile_context>

<pallas_src>
import math

import jax
import jax.numpy as jnp
from jax.experimental import pallas as pl
from jax.experimental.pallas import tpu as pltpu


def _layer_scale_kernel(x_ref, g_ref, o_ref):
    # x_ref: (tm, lane)  tile of the flattened input (x dtype)
    # g_ref: (1, lane)   per-lane scale in f32, VMEM-resident (constant index_map)
    # o_ref: (tm, lane)
    x = x_ref[...].astype(jnp.float32)          # free VALU slack in an HBM-bound kernel
    o_ref[...] = (x * g_ref[...]).astype(o_ref.dtype)


def _sublane_multiple(dtype) -> int:
    # f32 -> 8, bf16/f16 -> 16, int8/fp8 -> 32 (sub-32-bit dtypes pack along sublanes)
    return max(8, 32 // jnp.dtype(dtype).itemsize)


def layer_scale_forward(x, gamma):
    """LayerScale forward: x * gamma, with gamma broadcast along the last axis."""
    D = x.shape[-1]
    assert gamma.shape == (D,), (gamma.shape, D)
    total = x.size
    itemsize = jnp.dtype(x.dtype).itemsize
    sub = _sublane_multiple(x.dtype)

    # Keep gamma in f32 inside the kernel regardless of x's dtype.
    gamma32 = gamma.astype(jnp.float32)

    # ---- Lane-dense repack: lane = lcm(D, 128) whenever the flattened array
    # tiles evenly; gamma repeats exactly lane // D times per row.
    lane = math.lcm(D, 128)
    if total % lane == 0:
        g_row = gamma32 if lane == D else jnp.tile(gamma32, lane // D)
    else:
        # TODO(synk): pad-to-128 path for pathological D; this fallback uses masked stores.
        lane = D
        g_row = gamma32

    M = total // lane
    x2 = x.reshape(M, lane)                     # contiguous -> metadata-only reshape
    g2 = g_row.reshape(1, lane)

    # ---- Dtype-aware row tile: ~3 MiB per x block => ~12 MiB double-buffered in+out.
    per_block_budget = 3 * 1024 * 1024
    max_rows = max(sub, per_block_budget // (lane * itemsize))
    tm = min(M, max_rows)

    # Ensure large inputs split into >= 4 grid steps so the "parallel" axis can be
    # sharded across both TensorCores on v7x (harmless on single-TC chips).
    if M >= 4 * sub:
        tm = min(tm, pl.cdiv(M, 4))

    if tm < M:
        tm = max(sub, (tm // sub) * sub)        # align to sublane packing when tiling

    grid = (pl.cdiv(M, tm),)

    cost = pl.CostEstimate(
        flops=total,                             # one multiply per element
        transcendentals=0,
        bytes_accessed=2 * total * itemsize + lane * 4,
    )

    out = pl.pallas_call(
        _layer_scale_kernel,
        out_shape=jax.ShapeDtypeStruct((M, lane), x.dtype),
        grid=grid,
        in_specs=[
            pl.BlockSpec((tm, lane), lambda i: (i, 0)),
            pl.BlockSpec((1, lane), lambda i: (0, 0)),   # gamma: VMEM-resident row
        ],
        out_specs=pl.BlockSpec((tm, lane), lambda i: (i, 0)),
        compiler_params=pltpu.CompilerParams(
            dimension_semantics=("parallel",)),
        cost_estimate=cost,
        # PyTorch inplace=True buffer semantics: write the result into x's slab
        # when XLA can donate it (values identical either way).
        input_output_aliases={0: 0},
    )(x2, g2)

    # Metadata-only reshape back to the caller's layout.
    return out.reshape(x.shape)


if __name__ == "__main__":
    key = jax.random.PRNGKey(0)
    B, N, dim = 2, 8, 32            # (batch, seq, hidden) — typical LayerScale input
    init_values = 1e-5

    k1, k2, k3, k4 = jax.random.split(key, 4)
    x = jax.random.normal(k1, (B, N, dim), jnp.float32)
    # LayerScale init is init_values * ones(dim); perturb so the check is non-trivial.
    gamma = init_values * (1.0 + jax.random.normal(k2, (dim,), jnp.float32))

    y = jax.block_until_ready(layer_scale_forward(x, gamma))
    ref = x * gamma                 # PyTorch: x * self.gamma (broadcast over last dim)
    assert y.shape == x.shape, y.shape
    assert jnp.allclose(y, ref, atol=1e-6, rtol=1e-6)

    # Natively lane-dense path (dim % 128 == 0) with a multi-step grid (exercises
    # the >=4-way split and sublane-aligned tiling).
    x_big = jax.random.normal(k3, (4, 64, 128), jnp.float32)
    g_big = init_values * (1.0 + jax.random.normal(k4, (128,), jnp.float32))
    y_big = jax.block_until_ready(layer_scale_forward(x_big, g_big))
    assert jnp.allclose(y_big, x_big * g_big, atol=1e-6, rtol=1e-6)

    # bf16 activations with f32 gamma kept in f32 inside the kernel.
    x_bf = x.astype(jnp.bfloat16)
    y_bf = jax.block_until_ready(layer_scale_forward(x_bf, gamma))
    ref_bf = (x_bf.astype(jnp.float32) * gamma).astype(jnp.bfloat16)
    assert jnp.allclose(y_bf.astype(jnp.float32), ref_bf.astype(jnp.float32),
                        atol=1e-8, rtol=1e-2)

    print("KERNEL_OK")
</pallas_src>

<mosaic_0001>
module attributes {stable_mosaic.version = 11 : i64} {
  func.func @_layer_scale_kernel(%arg0: i32, %arg1: memref<4x128xf32, #tpu.memory_space<vmem>>, %arg2: memref<1x128xf32, #tpu.memory_space<vmem>>, %arg3: memref<4x128xf32, #tpu.memory_space<vmem>>) attributes {dimension_semantics = [#tpu.dimension_semantics<parallel>], iteration_bounds = array<i64: 1>, scalar_prefetch = 0 : i64, scratch_operands = 0 : i64, tpu.core_type = #tpu.core_type<tc>, window_params = [{transform_indices = @transform_0, window_bounds = array<i64: 4, 128>}, {pipeline_mode = #tpu.pipeline_mode<synchronous>, transform_indices = @transform_1, window_bounds = array<i64: 1, 128>}, {transform_indices = @transform_2, window_bounds = array<i64: 4, 128>}]} {
    %c0 = arith.constant 0 : index
    %c0_0 = arith.constant 0 : index
    %0 = vector.load %arg1[%c0, %c0_0] : memref<4x128xf32, #tpu.memory_space<vmem>>, vector<4x128xf32>
    %c0_1 = arith.constant 0 : index
    %c0_2 = arith.constant 0 : index
    %1 = vector.load %arg2[%c0_1, %c0_2] : memref<1x128xf32, #tpu.memory_space<vmem>>, vector<1x128xf32>
    %2 = vector.broadcast %1 : vector<1x128xf32> to vector<4x128xf32>
    %3 = arith.mulf %0, %2 : vector<4x128xf32>
    %c0_3 = arith.constant 0 : index
    %c0_4 = arith.constant 0 : index
    %4 = vector.load %arg3[%c0_3, %c0_4] : memref<4x128xf32, #tpu.memory_space<vmem>>, vector<4x128xf32>
    tpu.vector_store %arg3[%c0_3, %c0_4], %3 {strides = array<i32>} : memref<4x128xf32, #tpu.memory_space<vmem>>, vector<4x128xf32>,
    return
  }
  func.func @transform_0(%arg0: i32) -> (i32, i32) {
    %c0_i32 = arith.constant 0 : i32
    %c0_i32_0 = arith.constant 0 : i32
    return %arg0, %c0_i32 : i32, i32
  }
  func.func @transform_1(%arg0: i32) -> (i32, i32) {
    %c0_i32 = arith.constant 0 : i32
    %c0_i32_0 = arith.constant 0 : i32
    %c0_i32_1 = arith.constant 0 : i32
    return %c0_i32, %c0_i32_0 : i32, i32
  }
  func.func @transform_2(%arg0: i32) -> (i32, i32) {
    %c0_i32 = arith.constant 0 : i32
    %c0_i32_0 = arith.constant 0 : i32
    return %arg0, %c0_i32 : i32, i32
  }
}

</mosaic_0001>

<llo_original>
// kernel: tpu_custom_call.1
$region0: #{tpu_custom_call.1}
  #allocation0 [shape = 'u32[]', space=smem, size = 0x4, offset = 0x4, fixed_abs, tag = 'smem constant byte address 0x4 - core index']
  #allocation1 [shape = 'u32[144,128]{1,0:T(1,128)}', space=vmem, size = 0x12000, scoped, tag = 'internal scratch']
  %s0 = inlined_call_operand.hbm [shape: f32[4,128], index: 0, kind: input, shape index: {}, may-alias: {0,2}]
  %s1 = inlined_call_operand.vmem [shape: f32[1,128], index: 1, kind: input, shape index: {}]
  %s2 = inlined_call_operand.hbm [shape: f32[4,128], index: 2, kind: output, shape index: {}, may-alias: {0,2}]
  %s3 = sld [smem:[#allocation0]]
  $region22: #{tpu_custom_call.1} parent=0
    _
  %s5 = ssub.s32 1, %s3
  %s6 = scalar_select 0, %s5, %s3
  $region1: #{tpu_custom_call.1} parent=0
    #allocation2 [shape = 'u8[2048]{0}', space=vmem, size = 0x800, scoped, tag = 'input window, operand 0, single buffered']
    #allocation3 [shape = 's32[1]{0}', space=sflag, size = 0x4, scoped, tag = 'scoped memory for tpu_custom_call.1']
    #allocation4 [shape = 's32[1]{0}', space=sflag, size = 0x4, scoped, tag = 'scoped memory for tpu_custom_call.1']
    #allocation5 [shape = 'u8[2048]{0}', space=vmem, size = 0x800, scoped, tag = 'output window, operand 0, single buffered']
    %7 = vsyncpa [#allocation3], 0
    %8 = vsyncpa [#allocation4], 0
    // Predicated region
    $region2: #{tpu_custom_call.1} parent=1 // pred_check
      _
    $region3: #{tpu_custom_call.1} parent=1 // pred_check_branch
      %10 = sbr.rel (0) target = $region5
    $region4: #{tpu_custom_call.1} parent=1 // pred_region
      %s12 = ssub.s32 64, 64
      %13 = vsyncadd [#allocation3], %s12
      %s15 = sshll.u32 [#allocation2], 4
      %s16 = int_to_ptr.vmem [resolvable:$true] %s15
      %18 = dma.hbm_to_vmem [thread:$0]  %s0, 64, %s16, [#allocation3]
    $region5: #{tpu_custom_call.1} parent=1 // pred_fallthru
      _
    // Predicated region
    $region6: #{tpu_custom_call.1} parent=1 // pred_check
      _
    $region7: #{tpu_custom_call.1} parent=1 // pred_check_branch
      %20 = sbr.rel (0) target = $region9
    $region8: #{tpu_custom_call.1} parent=1 // pred_region
      _
    $region9: #{tpu_custom_call.1} parent=1 // pred_fallthru
      _
    // Predicated region
    $region10: #{tpu_custom_call.1} parent=1 // pred_check
      _
    $region11: #{tpu_custom_call.1} parent=1 // pred_check_branch
      %22 = sbr.rel (0) target = $region13
    $region12: #{tpu_custom_call.1} parent=1 // pred_region
      %23 = dma.done [#allocation3], 64
    $region13: #{tpu_custom_call.1} parent=1 // pred_fallthru
      _
    %v24 = vld [vmem:[#allocation2] sm:$0xf]
    %v25 = vld [vmem:[%s1] sm:$0x1]
    %v27 = vlaneseq
    %v28 = vshrl.u32 %v27, 7
    %v29 = vsub.s32 0, %v28
    %v30 = vrot.slane %v25, %v29
    %v32 = vmul.f32 %v24, %v30
    %33 = vst [vmem:[#allocation5] sm:$0xf] %v32
    // Predicated region
    $region14: #{tpu_custom_call.1} parent=1 // pred_check
      _
    $region15: #{tpu_custom_call.1} parent=1 // pred_check_branch
      %35 = sbr.rel (0) target = $region17
    $region16: #{tpu_custom_call.1} parent=1 // pred_region
      %s37 = ssub.s32 64, 64
      %38 = vsyncadd [#allocation4], %s37
      %s40 = sshll.u32 [#allocation5], 4
      %s41 = int_to_ptr.vmem [resolvable:$true] %s40
      %43 = dma.vmem_to_hbm [thread:$0]  %s41, 64, %s2, [#allocation4]
    $region17: #{tpu_custom_call.1} parent=1 // pred_fallthru
      _
    // Predicated region
    $region18: #{tpu_custom_call.1} parent=1 // pred_check
      _
    $region19: #{tpu_custom_call.1} parent=1 // pred_check_branch
      %45 = sbr.rel (0) target = $region21
    $region20: #{tpu_custom_call.1} parent=1 // pred_region
      %46 = dma.done [#allocation4], 64
    $region21: #{tpu_custom_call.1} parent=1 // pred_fallthru
      _
    %47 = vsyncpa [#allocation3], 1
    %48 = vsyncpa [#allocation4], 1

</llo_original>
